<compile_context>
chip_gen: v7x
topology: tpu7x:2x2x1
jax: 0.10.0
libtpu: 0.0.40
codegen_flags: <defaults>
</compile_context>

<pallas_src>
import functools

import jax
import jax.numpy as jnp
from jax.experimental import pallas as pl
from jax.experimental.pallas import tpu as pltpu

_VMEM_LIMIT = 32 * 1024 * 1024      # scoped-VMEM budget, safe on v5e/v6e/v7x
_TILE_BUDGET = 20 * 1024 * 1024     # target per-step VMEM for tile sizing
_MAX_HW_TILE = 2048                 # mem-bound gains flatten out past this


def _round_up(x, m):
    return ((x + m - 1) // m) * m


def _pick_hw_tile(hw, k, o):
    """Largest lane tile that keeps double-buffered VMEM well under budget."""
    # x f32 double-buffer + bf16 y / out double-buffers + f32 compute temps.
    per_col = 8 * k + 24 * o + 16
    t = _TILE_BUDGET // max(per_col, 1)
    t = min(t, _MAX_HW_TILE, _round_up(hw, 128))
    if t >= 256:
        t = (t // 256) * 256        # MXU-friendly multiple of 256
    return max(128, (t // 128) * 128)


def _conv_bn_stats_kernel(w_ref, x_ref, y_ref, st_ref, sum_sc, m2_sc, *,
                          thw, hw_total):
    """Per (batch, hw-tile): conv matmul (MXU, bf16 operands, f32 accum),
    bf16 y store, and a running Chan-merged (sum, centered M2) per-batch
    accumulator written out once per batch."""
    j = pl.program_id(1)
    last = pl.num_programs(1) - 1

    @pl.when(j == 0)
    def _():
        sum_sc[...] = jnp.zeros_like(sum_sc)
        m2_sc[...] = jnp.zeros_like(m2_sc)

    xb = x_ref[0].astype(jnp.bfloat16)                        # (K, thw) in-reg cast
    y = jnp.dot(w_ref[...], xb, preferred_element_type=jnp.float32)  # (O, thw) f32
    y_ref[0] = y.astype(y_ref.dtype)                          # bf16 intermediate

    # Per-tile BN partials; columns beyond hw_total (zero-padded tail of the
    # last tile) are masked out of both the sum and the centered M2.
    col = jax.lax.broadcasted_iota(jnp.int32, (1, thw), 1) + j * thw
    valid = (col < hw_total).astype(jnp.float32)              # (1, thw)
    n_t = jnp.minimum(hw_total - j * thw, thw).astype(jnp.float32)

    s_t = jnp.sum(y * valid, axis=1, keepdims=True)           # (O, 1)
    mean_t = s_t / n_t
    d = (y - mean_t) * valid
    m2_t = jnp.sum(d * d, axis=1, keepdims=True)              # (O, 1)

    # Chan parallel-variance running merge into the per-batch accumulator.
    run_n = (j * thw).astype(jnp.float32)                     # previous tiles are full
    run_sum = sum_sc[...]
    run_mean = run_sum / jnp.maximum(run_n, 1.0)
    delta = mean_t - run_mean
    sum_sc[...] = run_sum + s_t
    m2_sc[...] = m2_sc[...] + m2_t + delta * delta * (run_n * n_t / (run_n + n_t))

    @pl.when(j == last)
    def _():
        o = st_ref.shape[1]
        lane = jax.lax.broadcasted_iota(jnp.int32, (o, 128), 1)
        # lane 0 = per-batch sum, lane 1 = per-batch centered M2, rest zero.
        st_ref[0] = (jnp.where(lane == 0, sum_sc[...], 0.0)
                     + jnp.where(lane == 1, m2_sc[...], 0.0))


def _affine_kernel(y_ref, scale_ref, shift_ref, out_ref):
    """Folded BatchNorm affine: out = y*scale + shift, written directly in the
    final (N, O, OH*OW) layout and caller dtype (no trailing XLA pass)."""
    y = y_ref[0].astype(jnp.float32)
    out_ref[0] = (y * scale_ref[...] + shift_ref[...]).astype(out_ref.dtype)


def basic_conv2d(x_nchw, weight_ochw, gamma, beta, *, stride=1, padding=0,
                 dilation=1, eps=1e-5, hw_tile=None):
    """Conv2d(bias=False) + BatchNorm2d (training-mode batch stats). NCHW in/out."""
    N, C, H, W = x_nchw.shape
    O, Cw, KH, KW = weight_ochw.shape
    assert C == Cw
    OH = (H + 2 * padding - dilation * (KH - 1) - 1) // stride + 1
    OW = (W + 2 * padding - dilation * (KW - 1) - 1) // stride + 1
    M_hw = OH * OW
    out_dtype = x_nchw.dtype

    # ---- channel-major (N, K, OH*OW) operand --------------------------------
    if KH == 1 and KW == 1 and stride == 1 and padding == 0 and dilation == 1:
        # Translayer_* path: pure reshape, zero extra HBM passes.
        x_p = x_nchw.reshape(N, C, H * W)
    else:
        # TODO(synk): kernel_size>1 still materializes im2col patches in HBM;
        # an in-kernel halo-window DMA would cut that traffic further (unused
        # by VMUNetV2s, whose BasicConv2d layers are all 1x1 Translayers).
        xp = x_nchw
        if padding > 0:
            xp = jnp.pad(xp, ((0, 0), (0, 0), (padding, padding), (padding, padding)))
        taps = []
        for kh in range(KH):
            for kw in range(KW):
                h0, w0 = kh * dilation, kw * dilation
                taps.append(xp[:, :, h0:h0 + (OH - 1) * stride + 1:stride,
                               w0:w0 + (OW - 1) * stride + 1:stride])
        x_p = jnp.stack(taps, axis=2).reshape(N, C * KH * KW, M_hw)
    K = x_p.shape[1]
    w_mat = weight_ochw.reshape(O, K).astype(jnp.bfloat16)    # (c,kh,kw) ordering

    thw = hw_tile if hw_tile is not None else _pick_hw_tile(M_hw, K, O)
    thw = max(128, (thw // 128) * 128)
    hw_pad = _round_up(M_hw, thw)
    num_tiles = hw_pad // thw

    # Pad K to a 16-multiple only when needed (never for the real Translayer
    # channel counts) and zero-pad the ragged hw tail.
    k_rem = (-K) % 16
    hw_rem = hw_pad - M_hw
    if k_rem or hw_rem:
        x_p = jnp.pad(x_p, ((0, 0), (0, k_rem), (0, hw_rem)))
    if k_rem:
        w_mat = jnp.pad(w_mat, ((0, 0), (0, k_rem)))
    k_pad = K + k_rem

    # ---- kernel 1: conv matmul + per-batch BN partials ----------------------
    x_bytes = N * k_pad * hw_pad * x_p.dtype.itemsize
    bytes1 = x_bytes + O * k_pad * 2 + N * O * hw_pad * 2 + N * O * 128 * 4
    y_bf, stats = pl.pallas_call(
        functools.partial(_conv_bn_stats_kernel, thw=thw, hw_total=M_hw),
        out_shape=(jax.ShapeDtypeStruct((N, O, hw_pad), jnp.bfloat16),
                   jax.ShapeDtypeStruct((N, O, 128), jnp.float32)),
        grid_spec=pltpu.PrefetchScalarGridSpec(
            num_scalar_prefetch=0,
            grid=(N, num_tiles),
            in_specs=[
                pl.BlockSpec((O, k_pad), lambda n, j: (0, 0)),       # weights resident
                pl.BlockSpec((1, k_pad, thw), lambda n, j: (n, 0, j)),  # x tile (f32)
            ],
            out_specs=[
                pl.BlockSpec((1, O, thw), lambda n, j: (n, 0, j)),   # bf16 y
                pl.BlockSpec((1, O, 128), lambda n, j: (n, 0, 0)),   # per-batch stats
            ],
            scratch_shapes=[pltpu.VMEM((O, 1), jnp.float32),         # running sum
                            pltpu.VMEM((O, 1), jnp.float32)]),       # running M2
        compiler_params=pltpu.CompilerParams(
            dimension_semantics=("parallel", "arbitrary"),
            vmem_limit_bytes=_VMEM_LIMIT),
        cost_estimate=pl.CostEstimate(
            flops=2 * N * O * k_pad * hw_pad + 8 * N * O * hw_pad,
            transcendentals=0,
            bytes_accessed=int(bytes1)),
    )(w_mat, x_p)

    # ---- tiny cross-batch merge + finalize (hoisted out of the hot loop) ---
    sums = stats[:, :, 0]                                            # (N, O)
    m2s = stats[:, :, 1]                                             # (N, O)
    total = float(N * M_hw)
    mean = jnp.sum(sums, axis=0) / total                             # (O,)
    b_mean = sums / float(M_hw)
    m2 = jnp.sum(m2s, axis=0) + jnp.sum(
        float(M_hw) * (b_mean - mean[None, :]) ** 2, axis=0)
    inv_std = jax.lax.rsqrt(m2 / total + eps)
    g = gamma.astype(jnp.float32)
    scale = (g * inv_std).reshape(O, 1)
    shift = (beta.astype(jnp.float32) - mean * g * inv_std).reshape(O, 1)

    # ---- kernel 2: folded BN affine, final layout + dtype --------------------
    out_itemsize = jnp.dtype(out_dtype).itemsize
    bytes2 = N * O * hw_pad * (2 + out_itemsize) + 2 * O * 4
    out_p = pl.pallas_call(
        _affine_kernel,
        out_shape=jax.ShapeDtypeStruct((N, O, hw_pad), out_dtype),
        grid_spec=pltpu.PrefetchScalarGridSpec(
            num_scalar_prefetch=0,
            grid=(N, num_tiles),
            in_specs=[
                pl.BlockSpec((1, O, thw), lambda n, j: (n, 0, j)),
                pl.BlockSpec((O, 1), lambda n, j: (0, 0)),
                pl.BlockSpec((O, 1), lambda n, j: (0, 0)),
            ],
            out_specs=pl.BlockSpec((1, O, thw), lambda n, j: (n, 0, j))),
        compiler_params=pltpu.CompilerParams(
            dimension_semantics=("parallel", "parallel"),
            vmem_limit_bytes=_VMEM_LIMIT),
        cost_estimate=pl.CostEstimate(
            flops=2 * N * O * hw_pad,
            transcendentals=0,
            bytes_accessed=int(bytes2)),
    )(y_bf, scale, shift)

    if hw_rem:
        out_p = out_p[:, :, :M_hw]
    return out_p.reshape(N, O, OH, OW)


def _reference(x_nchw, weight_ochw, gamma, beta, *, stride, padding, dilation,
               eps=1e-5):
    """Pure-JAX reference: lax conv + training-mode batchnorm."""
    y = jax.lax.conv_general_dilated(
        x_nchw, weight_ochw,
        window_strides=(stride, stride),
        padding=[(padding, padding), (padding, padding)],
        rhs_dilation=(dilation, dilation),
        dimension_numbers=("NCHW", "OIHW", "NCHW"))
    mean = jnp.mean(y, axis=(0, 2, 3), keepdims=True)
    var = jnp.mean((y - mean) ** 2, axis=(0, 2, 3), keepdims=True)
    y_hat = (y - mean) * jax.lax.rsqrt(var + eps)
    return y_hat * gamma.reshape(1, -1, 1, 1) + beta.reshape(1, -1, 1, 1)


def _check(out, x, w, g, b, *, stride, padding, dilation, shape):
    # Reference is fed the same bf16-rounded operands (the kernel feeds the
    # MXU bf16 with f32 accumulation); the bf16 y intermediate adds ~1e-3
    # rounding, hence the 2e-2 tolerance.
    ref = _reference(x.astype(jnp.bfloat16).astype(jnp.float32),
                     w.astype(jnp.bfloat16).astype(jnp.float32),
                     g, b, stride=stride, padding=padding, dilation=dilation)
    assert out.shape == shape, (out.shape, shape)
    err = float(jnp.max(jnp.abs(out - ref)))
    assert jnp.allclose(out, ref, atol=2e-2, rtol=2e-2), err


if __name__ == "__main__":
    key = jax.random.PRNGKey(0)
    ks = jax.random.split(key, 9)

    # --- config A: 3x3 conv (generic BasicConv2d signature, im2col fallback) -
    N, Cin, H, W = 2, 4, 16, 16
    Cout = 8
    x = jax.random.normal(ks[0], (N, Cin, H, W), dtype=jnp.float32)
    w = jax.random.normal(ks[1], (Cout, Cin, 3, 3), dtype=jnp.float32) * 0.1
    gamma = 1.0 + 0.1 * jax.random.normal(ks[2], (Cout,), dtype=jnp.float32)
    beta = 0.1 * jax.random.normal(ks[3], (Cout,), dtype=jnp.float32)
    out = basic_conv2d(x, w, gamma, beta, stride=1, padding=1, dilation=1,
                       hw_tile=128)   # 2 hw tiles/batch -> exercises Chan merge
    out = jax.block_until_ready(out)
    _check(out, x, w, gamma, beta, stride=1, padding=1, dilation=1,
           shape=(N, Cout, H, W))

    # --- config B: 1x1 conv, the actual Translayer_* usage in VMUNetV2s ------
    Cin2, Cout2 = 32, 16
    x2 = jax.random.normal(ks[4], (N, Cin2, H, W), dtype=jnp.float32)
    w2 = jax.random.normal(ks[5], (Cout2, Cin2, 1, 1), dtype=jnp.float32) * 0.1
    g2 = jnp.ones((Cout2,), dtype=jnp.float32)
    b2 = jnp.zeros((Cout2,), dtype=jnp.float32)
    out2 = basic_conv2d(x2, w2, g2, b2, stride=1, padding=0, dilation=1)
    out2 = jax.block_until_ready(out2)
    _check(out2, x2, w2, g2, b2, stride=1, padding=0, dilation=1,
           shape=(N, Cout2, H, W))

    # --- config C: 1x1 conv on a non-128-aligned feature map (ragged tile) ---
    Cin3, Cout3, H3 = 16, 8, 5
    x3 = jax.random.normal(ks[6], (N, Cin3, H3, H3), dtype=jnp.float32)
    w3 = jax.random.normal(ks[7], (Cout3, Cin3, 1, 1), dtype=jnp.float32) * 0.1
    g3 = 1.0 + 0.1 * jax.random.normal(ks[8], (Cout3,), dtype=jnp.float32)
    b3 = jnp.zeros((Cout3,), dtype=jnp.float32)
    out3 = basic_conv2d(x3, w3, g3, b3, stride=1, padding=0, dilation=1)
    out3 = jax.block_until_ready(out3)
    _check(out3, x3, w3, g3, b3, stride=1, padding=0, dilation=1,
           shape=(N, Cout3, H3, H3))

    print("KERNEL_OK")
</pallas_src>

<mosaic_0001>
module attributes {stable_mosaic.version = 11 : i64} {
  func.func @_conv_bn_stats_kernel(%arg0: i32, %arg1: i32, %arg2: memref<8x48xbf16, #tpu.memory_space<vmem>>, %arg3: memref<1x48x128xf32, #tpu.memory_space<vmem>>, %arg4: memref<1x8x128xbf16, #tpu.memory_space<vmem>>, %arg5: memref<1x8x128xf32, #tpu.memory_space<vmem>>, %arg6: memref<8x1xf32, #tpu.memory_space<vmem>>, %arg7: memref<8x1xf32, #tpu.memory_space<vmem>>) attributes {dimension_semantics = [#tpu.dimension_semantics<parallel>, #tpu.dimension_semantics<arbitrary>], iteration_bounds = array<i64: 2, 2>, scalar_prefetch = 0 : i64, scratch_operands = 2 : i64, tpu.core_type = #tpu.core_type<tc>, window_params = [{pipeline_mode = #tpu.pipeline_mode<synchronous>, transform_indices = @transform_0, window_bounds = array<i64: 8, 48>}, {transform_indices = @transform_1, window_bounds = array<i64: 1, 48, 128>}, {transform_indices = @transform_2, window_bounds = array<i64: 1, 8, 128>}, {transform_indices = @transform_3, window_bounds = array<i64: 1, 8, 128>}]} {
    %c0_i32 = arith.constant 0 : i32
    %0 = arith.cmpi eq, %arg1, %c0_i32 : i32
    %1 = arith.extui %0 : i1 to i32
    %c0_i32_0 = arith.constant 0 : i32
    %2 = arith.cmpi ne, %1, %c0_i32_0 : i32
    scf.if %2 {
      %cst_24 = arith.constant 0.000000e+00 : f32
      %59 = vector.broadcast %cst_24 : f32 to vector<8x1xf32>
      %c0_25 = arith.constant 0 : index
      %c0_26 = arith.constant 0 : index
      %60 = vector.load %arg6[%c0_25, %c0_26] : memref<8x1xf32, #tpu.memory_space<vmem>>, vector<8x1xf32>
      tpu.vector_store %arg6[%c0_25, %c0_26], %59 {strides = array<i32>} : memref<8x1xf32, #tpu.memory_space<vmem>>, vector<8x1xf32>,
      %cst_27 = arith.constant 0.000000e+00 : f32
      %61 = vector.broadcast %cst_27 : f32 to vector<8x1xf32>
      %c0_28 = arith.constant 0 : index
      %c0_29 = arith.constant 0 : index
      %62 = vector.load %arg7[%c0_28, %c0_29] : memref<8x1xf32, #tpu.memory_space<vmem>>, vector<8x1xf32>
      tpu.vector_store %arg7[%c0_28, %c0_29], %61 {strides = array<i32>} : memref<8x1xf32, #tpu.memory_space<vmem>>, vector<8x1xf32>,
    } else {
    }
    %c0 = arith.constant 0 : index
    %c0_1 = arith.constant 0 : index
    %c0_2 = arith.constant 0 : index
    %3 = vector.load %arg3[%c0, %c0_1, %c0_2] : memref<1x48x128xf32, #tpu.memory_space<vmem>>, vector<1x48x128xf32>
    %4 = vector.shape_cast %3 : vector<1x48x128xf32> to vector<48x128xf32>
    %5 = arith.truncf %4 : vector<48x128xf32> to vector<48x128xbf16>
    %c0_3 = arith.constant 0 : index
    %c0_4 = arith.constant 0 : index
    %6 = vector.load %arg2[%c0_3, %c0_4] : memref<8x48xbf16, #tpu.memory_space<vmem>>, vector<8x48xbf16>
    %cst = arith.constant dense<0.000000e+00> : vector<8x128xf32>
    %7 = tpu.matmul %6, %5, %cst {dimension_numbers = #tpu.dot_dimension_numbers<[1], [0], [0], [1], [0, 0, 1, 1], [], []>} : vector<8x48xbf16>, vector<48x128xbf16>, vector<8x128xf32> -> vector<8x128xf32>
    %8 = arith.truncf %7 : vector<8x128xf32> to vector<8x128xbf16>
    %c0_5 = arith.constant 0 : index
    %c0_6 = arith.constant 0 : index
    %c0_7 = arith.constant 0 : index
    %9 = vector.load %arg4[%c0_5, %c0_6, %c0_7] : memref<1x8x128xbf16, #tpu.memory_space<vmem>>, vector<1x8x128xbf16>
    %10 = vector.shape_cast %9 : vector<1x8x128xbf16> to vector<8x128xbf16>
    %11 = vector.shape_cast %8 : vector<8x128xbf16> to vector<1x8x128xbf16>
    tpu.vector_store %arg4[%c0_5, %c0_6, %c0_7], %11 {strides = array<i32>} : memref<1x8x128xbf16, #tpu.memory_space<vmem>>, vector<1x8x128xbf16>,
    %12 = tpu.iota {dimensions = array<i32: 1>} : vector<1x128xi32>
    %c128_i32 = arith.constant 128 : i32
    %13 = arith.muli %arg1, %c128_i32 : i32
    %14 = vector.broadcast %13 : i32 to vector<1x128xi32>
    %15 = arith.addi %12, %14 : vector<1x128xi32>
    %c256_i32 = arith.constant 256 : i32
    %16 = vector.broadcast %c256_i32 : i32 to vector<1x128xi32>
    %17 = arith.cmpi slt, %15, %16 : vector<1x128xi32>
    %18 = arith.extui %17 : vector<1x128xi1> to vector<1x128xi32>
    %19 = arith.sitofp %18 : vector<1x128xi32> to vector<1x128xf32>
    %c128_i32_8 = arith.constant 128 : i32
    %20 = arith.muli %arg1, %c128_i32_8 : i32
    %c256_i32_9 = arith.constant 256 : i32
    %21 = arith.subi %c256_i32_9, %20 : i32
    %c128_i32_10 = arith.constant 128 : i32
    %22 = arith.minsi %21, %c128_i32_10 : i32
    %23 = arith.sitofp %22 : i32 to f32
    %24 = vector.broadcast %19 : vector<1x128xf32> to vector<8x128xf32>
    %25 = arith.mulf %7, %24 : vector<8x128xf32>
    %cst_11 = arith.constant dense<0.000000e+00> : vector<8xf32>
    %26 = vector.multi_reduction <add>, %25, %cst_11 [1] : vector<8x128xf32> to vector<8xf32>
    %27 = vector.shape_cast %26 : vector<8xf32> to vector<8x1xf32>
    %28 = vector.broadcast %23 : f32 to vector<8x1xf32>
    %29 = arith.divf %27, %28 : vector<8x1xf32>
    %30 = vector.broadcast %29 : vector<8x1xf32> to vector<8x128xf32>
    %31 = arith.subf %7, %30 : vector<8x128xf32>
    %32 = vector.broadcast %19 : vector<1x128xf32> to vector<8x128xf32>
    %33 = arith.mulf %31, %32 : vector<8x128xf32>
    %34 = arith.mulf %33, %33 : vector<8x128xf32>
    %cst_12 = arith.constant dense<0.000000e+00> : vector<8xf32>
    %35 = vector.multi_reduction <add>, %34, %cst_12 [1] : vector<8x128xf32> to vector<8xf32>
    %36 = vector.shape_cast %35 : vector<8xf32> to vector<8x1xf32>
    %c128_i32_13 = arith.constant 128 : i32
    %37 = arith.muli %arg1, %c128_i32_13 : i32
    %38 = arith.sitofp %37 : i32 to f32
    %c0_14 = arith.constant 0 : index
    %c0_15 = arith.constant 0 : index
    %39 = vector.load %arg6[%c0_14, %c0_15] : memref<8x1xf32, #tpu.memory_space<vmem>>, vector<8x1xf32>
    %cst_16 = arith.constant 1.000000e+00 : f32
    %40 = arith.maximumf %38, %cst_16 : f32
    %41 = vector.broadcast %40 : f32 to vector<8x1xf32>
    %42 = arith.divf %39, %41 : vector<8x1xf32>
    %43 = arith.subf %29, %42 : vector<8x1xf32>
    %44 = arith.addf %39, %27 : vector<8x1xf32>
    %c0_17 = arith.constant 0 : index
    %c0_18 = arith.constant 0 : index
    %45 = vector.load %arg6[%c0_17, %c0_18] : memref<8x1xf32, #tpu.memory_space<vmem>>, vector<8x1xf32>
    tpu.vector_store %arg6[%c0_17, %c0_18], %44 {strides = array<i32>} : memref<8x1xf32, #tpu.memory_space<vmem>>, vector<8x1xf32>,
    %c0_19 = arith.constant 0 : index
    %c0_20 = arith.constant 0 : index
    %46 = vector.load %arg7[%c0_19, %c0_20] : memref<8x1xf32, #tpu.memory_space<vmem>>, vector<8x1xf32>
    %47 = arith.addf %46, %36 : vector<8x1xf32>
    %48 = arith.mulf %43, %43 : vector<8x1xf32>
    %49 = arith.mulf %38, %23 : f32
    %50 = arith.addf %38, %23 : f32
    %51 = arith.divf %49, %50 : f32
    %52 = vector.broadcast %51 : f32 to vector<8x1xf32>
    %53 = arith.mulf %48, %52 : vector<8x1xf32>
    %54 = arith.addf %47, %53 : vector<8x1xf32>
    %c0_21 = arith.constant 0 : index
    %c0_22 = arith.constant 0 : index
    %55 = vector.load %arg7[%c0_21, %c0_22] : memref<8x1xf32, #tpu.memory_space<vmem>>, vector<8x1xf32>
    tpu.vector_store %arg7[%c0_21, %c0_22], %54 {strides = array<i32>} : memref<8x1xf32, #tpu.memory_space<vmem>>, vector<8x1xf32>,
    %c1_i32 = arith.constant 1 : i32
    %56 = arith.cmpi eq, %arg1, %c1_i32 : i32
    %57 = arith.extui %56 : i1 to i32
    %c0_i32_23 = arith.constant 0 : i32
    %58 = arith.cmpi ne, %57, %c0_i32_23 : i32
    scf.if %58 {
      %59 = tpu.iota {dimensions = array<i32: 1>} : vector<8x128xi32>
      %c0_i32_24 = arith.constant 0 : i32
      %60 = vector.broadcast %c0_i32_24 : i32 to vector<8x128xi32>
      %61 = arith.cmpi eq, %59, %60 : vector<8x128xi32>
      %c0_25 = arith.constant 0 : index
      %c0_26 = arith.constant 0 : index
      %62 = vector.load %arg6[%c0_25, %c0_26] : memref<8x1xf32, #tpu.memory_space<vmem>>, vector<8x1xf32>
      %cst_27 = arith.constant 0.000000e+00 : f32
      %63 = vector.shape_cast %62 : vector<8x1xf32> to vector<8x1xf32>
      %64 = vector.broadcast %63 : vector<8x1xf32> to vector<8x128xf32>
      %65 = vector.broadcast %cst_27 : f32 to vector<8x128xf32>
      %66 = arith.select %61, %64, %65 : vector<8x128xi1>, vector<8x128xf32>
      %c1_i32_28 = arith.constant 1 : i32
      %67 = vector.broadcast %c1_i32_28 : i32 to vector<8x128xi32>
      %68 = arith.cmpi eq, %59, %67 : vector<8x128xi32>
      %c0_29 = arith.constant 0 : index
      %c0_30 = arith.constant 0 : index
      %69 = vector.load %arg7[%c0_29, %c0_30] : memref<8x1xf32, #tpu.memory_space<vmem>>, vector<8x1xf32>
      %cst_31 = arith.constant 0.000000e+00 : f32
      %70 = vector.shape_cast %69 : vector<8x1xf32> to vector<8x1xf32>
      %71 = vector.broadcast %70 : vector<8x1xf32> to vector<8x128xf32>
      %72 = vector.broadcast %cst_31 : f32 to vector<8x128xf32>
      %73 = arith.select %68, %71, %72 : vector<8x128xi1>, vector<8x128xf32>
      %74 = arith.addf %66, %73 : vector<8x128xf32>
      %c0_32 = arith.constant 0 : index
      %c0_33 = arith.constant 0 : index
      %c0_34 = arith.constant 0 : index
      %75 = vector.load %arg5[%c0_32, %c0_33, %c0_34] : memref<1x8x128xf32, #tpu.memory_space<vmem>>, vector<1x8x128xf32>
      %76 = vector.shape_cast %75 : vector<1x8x128xf32> to vector<8x128xf32>
      %77 = vector.shape_cast %74 : vector<8x128xf32> to vector<1x8x128xf32>
      tpu.vector_store %arg5[%c0_32, %c0_33, %c0_34], %77 {strides = array<i32>} : memref<1x8x128xf32, #tpu.memory_space<vmem>>, vector<1x8x128xf32>,
    } else {
    }
    return
  }
  func.func @transform_0(%arg0: i32, %arg1: i32) -> (i32, i32) {
    %c0_i32 = arith.constant 0 : i32
    %c0_i32_0 = arith.constant 0 : i32
    %c0_i32_1 = arith.constant 0 : i32
    return %c0_i32, %c0_i32_0 : i32, i32
  }
  func.func @transform_1(%arg0: i32, %arg1: i32) -> (i32, i32, i32) {
    %c0_i32 = arith.constant 0 : i32
    %c0_i32_0 = arith.constant 0 : i32
    return %arg0, %c0_i32, %arg1 : i32, i32, i32
  }
  func.func @transform_2(%arg0: i32, %arg1: i32) -> (i32, i32, i32) {
    %c0_i32 = arith.constant 0 : i32
    %c0_i32_0 = arith.constant 0 : i32
    return %arg0, %c0_i32, %arg1 : i32, i32, i32
  }
  func.func @transform_3(%arg0: i32, %arg1: i32) -> (i32, i32, i32) {
    %c0_i32 = arith.constant 0 : i32
    %c0_i32_0 = arith.constant 0 : i32
    %c0_i32_1 = arith.constant 0 : i32
    return %arg0, %c0_i32, %c0_i32_0 : i32, i32, i32
  }
}

</mosaic_0001>

<llo_original>
// kernel: tpu_custom_call.1
$region0: #{tpu_custom_call.1}
  #allocation0 [shape = 'u32[]', space=smem, size = 0x4, offset = 0x4, fixed_abs, tag = 'smem constant byte address 0x4 - core index']
  #allocation1 [shape = 'u32[144,128]{1,0:T(1,128)}', space=vmem, size = 0x12000, scoped, tag = 'internal scratch']
  #allocation2 [shape = 'f32[8,1]{1,0:T(8,128)}', space=vmem, size = 0x1000, scoped, tag = 'scratch operand']
  #allocation3 [shape = 'f32[8,1]{1,0:T(8,128)}', space=vmem, size = 0x1000, scoped, tag = 'scratch operand']
  %s0 = inlined_call_operand.hbm [shape: bf16[8,48], index: 0, kind: input, shape index: {}]
  %s1 = inlined_call_operand.hbm [shape: f32[2,48,256], index: 1, kind: input, shape index: {}]
  %s2 = inlined_call_operand.hbm [shape: bf16[2,8,256], index: 2, kind: output, shape index: {0}]
  %s3 = inlined_call_operand.hbm [shape: f32[2,8,128], index: 3, kind: output, shape index: {1}]
  %4 = xla_tuple %s2, %s3
  %s5 = sld [smem:[#allocation0]]
  $region65: #{tpu_custom_call.1} parent=0
    _
  %s7 = ssub.s32 1, %s5
  %s8 = scalar_select 0, %s7, %s5
  $region1: #{tpu_custom_call.1} parent=0
    #allocation4 [shape = 'u8[2048]{0}', space=vmem, size = 0x800, scoped, tag = 'input window, operand 0, single buffered']
    #allocation5 [shape = 's32[2]{0}', space=sflag, size = 0x8, scoped, tag = 'scoped memory for tpu_custom_call.1']
    #allocation6 [shape = 's32[2]{0}', space=sflag, size = 0x8, scoped, tag = 'scoped memory for tpu_custom_call.1']
    #allocation7 [shape = 'u8[49152]{0}', space=vmem, size = 0xc000, scoped, tag = 'input window, operand 1']
    #allocation8 [shape = 's32[2]{0}', space=sflag, size = 0x8, scoped, tag = 'scoped memory for tpu_custom_call.1']
    #allocation9 [shape = 'u8[4096]{0}', space=vmem, size = 0x1000, scoped, tag = 'output window, operand 0']
    #allocation10 [shape = 'u8[8192]{0}', space=vmem, size = 0x2000, scoped, tag = 'output window, operand 1']
    #allocation11 [shape = 's32[2]{0}', space=sflag, size = 0x8, scoped, tag = 'scoped memory for tpu_custom_call.1']
    %9 = vsyncpa [#allocation5], 0
    %10 = vsyncpa [#allocation8], 0
    %s11 = scalar_lea.sflag [#allocation8], 1
    %12 = vsyncpa %s11, 0
    %13 = vsyncpa [#allocation6], 0
    %s14 = scalar_lea.sflag [#allocation6], 1
    %15 = vsyncpa %s14, 0
    %16 = vsyncpa [#allocation11], 0
    %s17 = scalar_lea.sflag [#allocation11], 1
    %18 = vsyncpa %s17, 0
    loop: start=0, step=1, limit=6
    $region2: #{tpu_custom_call.1} parent=1 // loop_pre_header
      _
    $region3: #{tpu_custom_call.1} parent=1 // loop_header
      %s20 = sphi 0, %s24
      %p21 = scmp.ge.s32.totalorder %s20, 6
      %s27 = sphi 0, %s39
      %s28 = sphi 0, %s35
      %s29 = sphi 0, %s27
      %s30 = sphi 0, %s28
      %s31 = sphi 0, %s29
      %s32 = sphi 0, %s30
      %s40 = sphi 0, %s40
      %s42 = sphi 0, %s40
      %s43 = sphi 0, %s42
      %s57 = sphi 0, %s43
      %s65 = sphi 0, %s67
      %s68 = sphi 0, %s65
      %s69 = sphi 0, %s68
      %s85 = sphi 0, %s69
      %s93 = sphi 0, %s95
      %s96 = sphi 0, %s93
      %s97 = sphi 0, %s96
      %s113 = sphi 0, %s97
      %s119 = sphi 0, %s121
      %s122 = sphi 0, %s119
      %s123 = sphi 0, %s122
      %s139 = sphi 0, %s123
    $region4: #{tpu_custom_call.1} parent=1 // loop_header_branch
      %23 = sbr.rel (%p21) target = $region8
    $region5: #{tpu_custom_call.1} parent=1 // loop_body
      %s25 = ssub.s32 %s20, 1
      %s26 = ssub.s32 %s20, 2
      %s33 = sadd.s32 1, %s28
      %p34 = scmp.ge.s32.totalorder %s33, 2
      %s35 = scalar_select %p34, 0, %s33
      %s36 = sadd.s32 1, %s27
      %s37 = scalar_select %p34, %s36, %s27
      %p38 = scmp.ge.s32.totalorder %s37, 2
      %s39 = scalar_select %p38, 0, %s37
      %s41 = sadd.s32 %s40, 1
      %p44 = scmp.eq.s32.totalorder %s20, 3
      %p45 = scmp.ne.s32.totalorder %s40, %s42
      %p46 = scmp.eq.s32.totalorder %s20, 0
      %p47 = por %p45, %p46
      %p48 = scmp.ne.s32.totalorder %s40, %s42
      %p49 = scmp.eq.s32.totalorder %s25, 3
      %p50 = por %p48, %p49
      %p51 = scmp.ne.s32.totalorder %s42, %s43
      %p52 = scmp.eq.s32.totalorder %s25, 0
      %p53 = por %p51, %p52
      %p54 = scmp.ne.s32.totalorder %s42, %s43
      %p55 = scmp.eq.s32.totalorder %s26, 3
      %p56 = por %p54, %p55
      %p58 = scmp.ne.s32.totalorder %s43, %s57
      %p59 = scmp.eq.s32.totalorder %s26, 0
      %p60 = por %p58, %p59
      %s61 = ssub.s32 %s27, %s39
      %s62 = ssub.s32 %s28, %s35
      %s63 = sor.u32 %s61, %s62
      %p64 = scmp.eq.s32.totalorder %s63, 0
      %s66 = sadd.s32 %s65, 1
      %s67 = scalar_select %p64, %s65, %s66
      %p70 = pneg %p64
      %p71 = scmp.eq.s32.totalorder %s20, 3
      %p72 = por %p70, %p71
      %p73 = scmp.ne.s32.totalorder %s65, %s68
      %p74 = scmp.eq.s32.totalorder %s20, 0
      %p75 = por %p73, %p74
      %p76 = scmp.ne.s32.totalorder %s65, %s68
      %p77 = scmp.eq.s32.totalorder %s25, 3
      %p78 = por %p76, %p77
      %p79 = scmp.ne.s32.totalorder %s68, %s69
      %p80 = scmp.eq.s32.totalorder %s25, 0
      %p81 = por %p79, %p80
      %p82 = scmp.ne.s32.totalorder %s68, %s69
      %p83 = scmp.eq.s32.totalorder %s26, 3
      %p84 = por %p82, %p83
      %p86 = scmp.ne.s32.totalorder %s69, %s85
      %p87 = scmp.eq.s32.totalorder %s26, 0
      %p88 = por %p86, %p87
      %s89 = ssub.s32 %s27, %s39
      %s90 = ssub.s32 %s28, %s35
      %s91 = sor.u32 %s89, %s90
      %p92 = scmp.eq.s32.totalorder %s91, 0
      %s94 = sadd.s32 %s93, 1
      %s95 = scalar_select %p92, %s93, %s94
      %p98 = pneg %p92
      %p99 = scmp.eq.s32.totalorder %s20, 3
      %p100 = por %p98, %p99
      %p101 = scmp.ne.s32.totalorder %s93, %s96
      %p102 = scmp.eq.s32.totalorder %s20, 0
      %p103 = por %p101, %p102
      %p104 = scmp.ne.s32.totalorder %s93, %s96
      %p105 = scmp.eq.s32.totalorder %s25, 3
      %p106 = por %p104, %p105
      %p107 = scmp.ne.s32.totalorder %s96, %s97
      %p108 = scmp.eq.s32.totalorder %s25, 0
      %p109 = por %p107, %p108
      %p110 = scmp.ne.s32.totalorder %s96, %s97
      %p111 = scmp.eq.s32.totalorder %s26, 3
      %p112 = por %p110, %p111
      %p114 = scmp.ne.s32.totalorder %s97, %s113
      %p115 = scmp.eq.s32.totalorder %s26, 0
      %p116 = por %p114, %p115
      %s117 = ssub.s32 %s27, %s39
      %p118 = scmp.eq.s32.totalorder %s117, 0
      %s120 = sadd.s32 %s119, 1
      %s121 = scalar_select %p118, %s119, %s120
      %p124 = pneg %p118
      %p125 = scmp.eq.s32.totalorder %s20, 3
      %p126 = por %p124, %p125
      %p127 = scmp.ne.s32.totalorder %s119, %s122
      %p128 = scmp.eq.s32.totalorder %s20, 0
      %p129 = por %p127, %p128
      %p130 = scmp.ne.s32.totalorder %s119, %s122
      %p131 = scmp.eq.s32.totalorder %s25, 3
      %p132 = por %p130, %p131
      %p133 = scmp.ne.s32.totalorder %s122, %s123
      %p134 = scmp.eq.s32.totalorder %s25, 0
      %p135 = por %p133, %p134
      %p136 = scmp.ne.s32.totalorder %s122, %s123
      %p137 = scmp.eq.s32.totalorder %s26, 3
      %p138 = por %p136, %p137
      %p140 = scmp.ne.s32.totalorder %s123, %s139
      %p141 = scmp.eq.s32.totalorder %s26, 0
      %p142 = por %p140, %p141
      %p143 = scmp.le.s32.totalorder 1, %s20
      %p144 = scmp.lt.s32.totalorder %s20, 5
      %p145 = pnand %p143, %p144
      %p146 = pneg %p145
      // Predicated region
      $region9: #{tpu_custom_call.1} parent=5 // pred_check
        _
      $region10: #{tpu_custom_call.1} parent=5 // pred_check_branch
        %148 = sbr.rel (%p145) target = $region12
      $region11: #{tpu_custom_call.1} parent=5 // pred_region
        %s149 = ssub.s32 %s20, 1
        // Predicated region
        $region13: #{tpu_custom_call.1} parent=11 // pred_check
          %p150 = pneg %p53
        $region14: #{tpu_custom_call.1} parent=11 // pred_check_branch
          %152 = sbr.rel (%p150) target = $region16
        $region15: #{tpu_custom_call.1} parent=11 // pred_region
          %s154 = ssub.s32 64, 64
          %155 = vsyncadd [#allocation5], %s154
          %s157 = sshll.u32 [#allocation4], 4
          %s158 = int_to_ptr.vmem [resolvable:$true] %s157
          %160 = dma.hbm_to_vmem [thread:$0]  %s0, 64, %s158, [#allocation5]
        $region16: #{tpu_custom_call.1} parent=11 // pred_fallthru
          _
      $region12: #{tpu_custom_call.1} parent=5 // pred_fallthru
        _
      %p161 = scmp.lt.s32.totalorder %s20, 4
      // Predicated region
      $region17: #{tpu_custom_call.1} parent=5 // pred_check
        %p162 = pneg %p161
      $region18: #{tpu_custom_call.1} parent=5 // pred_check_branch
        %164 = sbr.rel (%p162) target = $region20
      $region19: #{tpu_custom_call.1} parent=5 // pred_region
        // Predicated region
        $region21: #{tpu_custom_call.1} parent=19 // pred_check
          %p165 = pneg %p75
        $region22: #{tpu_custom_call.1} parent=19 // pred_check_branch
          %167 = sbr.rel (%p165) target = $region24
        $region23: #{tpu_custom_call.1} parent=19 // pred_region
          %s168 = sand.u32 %s65, 1
          %s169 = scalar_lea.sflag [#allocation8], %s168
          %s170 = sand.u32 %s65, 1
          %s171 = smul.addr %s170, 48
          %s172 = scalar_lea.vmem [#allocation7], %s171
          %s174 = ssub.s32 768, 768
          %175 = vsyncadd %s169, %s174
          %s176 = smul.addr %s27, 12
          %s177 = sadd.s32 %s28, %s176
          %s178 = smul.addr %s177, 128
          %s179 = scalar_lea.hbm %s1, %s178
          %s180 = sshll.u32 %s172, 4
          %s181 = int_to_ptr.vmem [resolvable:$true] %s180
          %186 = dma.hbm_to_vmem [thread:$0]  %s179, 768, %s181, %s169, 256, 128, 8
        $region24: #{tpu_custom_call.1} parent=19 // pred_fallthru
          _
      $region20: #{tpu_custom_call.1} parent=5 // pred_fallthru
        _
      %p187 = scmp.le.s32.totalorder 1, %s20
      %p188 = scmp.lt.s32.totalorder %s20, 5
      %p189 = pnand %p187, %p188
      %p190 = pneg %p189
      // Predicated region
      $region25: #{tpu_custom_call.1} parent=5 // pred_check
        _
      $region26: #{tpu_custom_call.1} parent=5 // pred_check_branch
        %192 = sbr.rel (%p189) target = $region28
      $region27: #{tpu_custom_call.1} parent=5 // pred_region
        %s193 = ssub.s32 %s20, 1
        // Predicated region
        $region29: #{tpu_custom_call.1} parent=27 // pred_check
          %p194 = pneg %p53
        $region30: #{tpu_custom_call.1} parent=27 // pred_check_branch
          %196 = sbr.rel (%p194) target = $region32
        $region31: #{tpu_custom_call.1} parent=27 // pred_region
          %197 = dma.done [#allocation5], 64
        $region32: #{tpu_custom_call.1} parent=27 // pred_fallthru
          _
        %s198 = sand.u32 %s68, 1
        %s199 = scalar_lea.sflag [#allocation8], %s198
        %s200 = sand.u32 %s68, 1
        %s201 = smul.addr %s200, 48
        %s202 = scalar_lea.vmem [#allocation7], %s201
        // Predicated region
        $region33: #{tpu_custom_call.1} parent=27 // pred_check
          %p203 = pneg %p81
        $region34: #{tpu_custom_call.1} parent=27 // pred_check_branch
          %205 = sbr.rel (%p203) target = $region36
        $region35: #{tpu_custom_call.1} parent=27 // pred_region
          %206 = dma.done %s199, 768
        $region36: #{tpu_custom_call.1} parent=27 // pred_fallthru
          _
        %p207 = pneg %p53
        %p208 = pneg %p50
        %s209 = sand.u32 %s68, 1
        %s210 = scalar_lea.sflag [#allocation8], %s209
        %s211 = sand.u32 %s68, 1
        %s212 = smul.addr %s211, 48
        %s213 = scalar_lea.vmem [#allocation7], %s212
        %p214 = pneg %p81
        %p215 = pneg %p78
        %p216 = pneg %p109
        %p217 = pneg %p106
        %s218 = sand.u32 %s96, 1
        %s219 = scalar_lea.sflag [#allocation6], %s218
        %s220 = sand.u32 %s96, 1
        %s221 = smul.addr %s220, 4
        %s222 = scalar_lea.vmem [#allocation9], %s221
        %p223 = pneg %p135
        %p224 = pneg %p132
        %s225 = sand.u32 %s122, 1
        %s226 = scalar_lea.sflag [#allocation11], %s225
        %s227 = sand.u32 %s122, 1
        %s228 = smul.addr %s227, 8
        %s229 = scalar_lea.vmem [#allocation10], %s228
        %p231 = scmp.eq.s32.totalorder %s30, 0
        // Predicated region
        $region37: #{tpu_custom_call.1} parent=27 // pred_check
          %p232 = pneg %p231
        $region38: #{tpu_custom_call.1} parent=27 // pred_check_branch
          %234 = sbr.rel (%p232) target = $region40
        $region39: #{tpu_custom_call.1} parent=27 // pred_region
          %vm235 = vcmask 7168
          %236 = vst.msk [vmem:[#allocation2] sm:$0xff] %vm235, 0.0
          %237 = vst.msk [vmem:[#allocation3] sm:$0xff] %vm235, 0.0
        $region40: #{tpu_custom_call.1} parent=27 // pred_fallthru
          _
        %v238 = vld [vmem:[%s202] sm:$0xff]
        %v239 = vld [vmem:[%s202 + $0x8] sm:$0xff]
        %v240 = vld [vmem:[%s202 + $0x10] sm:$0xff]
        %v241 = vld [vmem:[%s202 + $0x18] sm:$0xff]
        %v242 = vld [vmem:[%s202 + $0x20] sm:$0xff]
        %v243 = vld [vmem:[%s202 + $0x28] sm:$0xff]
        %v244 = vpack.c.bf16 %v239, %v238
        %v245 = vpack.c.bf16 %v241, %v240
        %v246 = vpack.c.bf16 %v243, %v242
        %v247 = vld [vmem:[#allocation4] sm:$0xf]
        %vm248 = vcmask 392192
        %v250 = vsel %vm248, %v247, 0
        %252 = vmatprep.subr.bf16.mxu0 0
        %253 = vmatpush1.bf16.msra.mxu0 %v244
        %254 = vmatprep.subr.bf16.mxu0 0
        %255 = vmatpush1.bf16.msra.mxu0 %v245
        %256 = vmatprep.subr.bf16.mxu0 0
        %257 = vmatpush1.bf16.msra.mxu0 %v246
        %258 = vmatprep.subr.bf16.mxu0 0
        %259 = vmatpush1.bf16.msra.mxu0 0
        %260 = vmatprep.subr.bf16.mxu0 0
        %261 = vmatpush1.bf16.msra.mxu0 0
        %262 = vmatprep.subr.bf16.mxu0 0
        %263 = vmatpush1.bf16.msra.mxu0 0
        %264 = vmatprep.subr.bf16.mxu0 0
        %265 = vmatpush1.bf16.msra.mxu0 0
        %266 = vmatprep.subr.bf16.mxu0 0
        %267 = vmatpush1.bf16.msra.mxu0 0
        %268 = vmatprep.subr.bf16.mxu0 0
        %269 = vmatpush1.bf16.msra.mxu0 0
        %270 = vmatprep.subr.bf16.mxu0 0
        %271 = vmatpush1.bf16.msra.mxu0 0
        %272 = vmatprep.subr.bf16.mxu0 0
        %273 = vmatpush1.bf16.msra.mxu0 0
        %274 = vmatprep.subr.bf16.mxu0 0
        %275 = vmatpush1.bf16.msra.mxu0 0
        %276 = vmatprep.subr.bf16.mxu0 0
        %277 = vmatpush1.bf16.msra.mxu0 0
        %278 = vmatprep.subr.bf16.mxu0 0
        %279 = vmatpush1.bf16.msra.mxu0 0
        %280 = vmatprep.subr.bf16.mxu0 0
        %281 = vmatpush1.bf16.msra.mxu0 0
        %282 = vmatprep.subr.bf16.mxu0 0
        %283 = vmatpush1.bf16.msra.mxu0 0
        %284 = vmatprep.mubr.bf16.mxu0 0
        %285 = vmatmul.mubr.bf16.gmra.mrb[0].mxu0 %v250
        %v286 = vpop.f32.mrb[0].mxu0
        %v287 = vadd.f32 0.0, %v286
        %v288 = vpop.f32.mrb[0].mxu0
        %v289 = vpop.f32.mrb[0].mxu0
        %v290 = vpop.f32.mrb[0].mxu0
        %291 = vdwg.mxu0
        %v292 = vpack.c.bf16 %v287, %v287
        %293 = vst [vmem:[%s222] sm:$0xf] %v292
        %v294 = vlaneseq
        %v295 = vand.u32 %v294, 127
        %s296 = smul.u32 %s30, 128
        %v297 = vstv %s296
        %v298 = vadd.s32 %v295, %v297
        %vm299 = vcmp.lt.s32.totalorder %v298, 256
        %v300 = vsel %vm299, 1, 0
        %v301 = vcvt.s32.f32 %v300
        %s302 = ssub.s32 256, %s296
        %p303 = scmp.lt.s32.totalorder %s302, 128
        %s304 = scalar_select %p303, %s302, 128
        %s305 = scvt.s32.f32 %s304
        %v306 = vmul.f32 %v287, %v301
        %307 = vadd.xlane.f32.xlu0 %v306
        %v308 = vpop.xlane.xlu0 %307
        %v309 = vstv %s305
        %v310 = vrcp.pop %v309
        %v311 = vmul.f32 %v308, %v310
        %v312 = vsub.f32 %v287, %v311
        %v313 = vmul.f32 %v312, %v301
        %v314 = vmul.f32 %v313, %v313
        %315 = vadd.xlane.f32.xlu0 %v314
        %v316 = vpop.xlane.xlu0 %315
        %s317 = scvt.s32.f32 %s296
        %v318 = vld [vmem:[#allocation2] sm:$0xff]
        %s319 = smax.f32 %s317, 1.0
        %v320 = vstv %s319
        %v321 = vrcp.pop %v320
        %v322 = vmul.f32 %v318, %v321
        %v323 = vsub.f32 %v311, %v322
        %v324 = vadd.f32 %v318, %v308
        %vm325 = vcmask 7168
        %326 = vst.msk [vmem:[#allocation2] sm:$0xff] %vm325, %v324
        %v327 = vld [vmem:[#allocation3] sm:$0xff]
        %v328 = vadd.f32 %v327, %v316
        %v329 = vmul.f32 %v323, %v323
        %s330 = smul.f32 %s317, %s305
        %s331 = sadd.f32 %s317, %s305
        %v332 = vstv %s331
        %v333 = vrcp.pop %v332
        %s334 = vtos %v333
        %s335 = smul.f32 %s330, %s334
        %v336 = vstv %s335
        %v337 = vmul.f32 %v329, %v336
        %v338 = vadd.f32 %v328, %v337
        %339 = vst.msk [vmem:[#allocation3] sm:$0xff] %vm325, %v338
        %p340 = scmp.eq.s32.totalorder %s30, 1
        // Predicated region
        $region41: #{tpu_custom_call.1} parent=27 // pred_check
          %p341 = pneg %p340
        $region42: #{tpu_custom_call.1} parent=27 // pred_check_branch
          %343 = sbr.rel (%p341) target = $region44
        $region43: #{tpu_custom_call.1} parent=27 // pred_region
          %vm344 = vcmp.eq.s32.totalorder %v295, 0
          %v345 = vld [vmem:[#allocation2] sm:$0xff]
          %347 = vset.pattern.permute.xlu0 0
          %348 = vperm.xlu0 %347, %v345
          %v349 = vpop.permute.xlu0 %348
          %v351 = vsel %vm344, %v349, 0.0
          %vm352 = vcmp.eq.s32.totalorder %v295, 1
          %v353 = vld [vmem:[#allocation3] sm:$0xff]
          %355 = vset.pattern.permute.xlu0 0
          %356 = vperm.xlu0 %355, %v353
          %v357 = vpop.permute.xlu0 %356
          %v359 = vsel %vm352, %v357, 0.0
          %v360 = vadd.f32 %v351, %v359
          %361 = vst [vmem:[%s229] sm:$0xff] %v360
        $region44: #{tpu_custom_call.1} parent=27 // pred_fallthru
          _
        %s362 = sand.u32 %s96, 1
        %s363 = scalar_lea.sflag [#allocation6], %s362
        %s364 = sand.u32 %s96, 1
        %s365 = smul.addr %s364, 4
        %s366 = scalar_lea.vmem [#allocation9], %s365
        %s367 = sand.u32 %s122, 1
        %s368 = scalar_lea.sflag [#allocation11], %s367
        %s369 = sand.u32 %s122, 1
        %s370 = smul.addr %s369, 8
        %s371 = scalar_lea.vmem [#allocation10], %s370
        // Predicated region
        $region45: #{tpu_custom_call.1} parent=27 // pred_check
          %p372 = pneg %p106
        $region46: #{tpu_custom_call.1} parent=27 // pred_check_branch
          %374 = sbr.rel (%p372) target = $region48
        $region47: #{tpu_custom_call.1} parent=27 // pred_region
          %s376 = ssub.s32 64, 64
          %377 = vsyncadd %s363, %s376
          %s378 = smul.addr %s29, 2
          %s379 = sadd.s32 %s30, %s378
          %s380 = smul.addr %s379, 64
          %s381 = scalar_lea.hbm %s2, %s380
          %s383 = sshll.u32 %s366, 4
          %s384 = int_to_ptr.vmem [resolvable:$true] %s383
          %386 = dma.vmem_to_hbm [thread:$0]  %s384, 64, %s381, %s363
        $region48: #{tpu_custom_call.1} parent=27 // pred_fallthru
          _
        // Predicated region
        $region49: #{tpu_custom_call.1} parent=27 // pred_check
          %p387 = pneg %p132
        $region50: #{tpu_custom_call.1} parent=27 // pred_check_branch
          %389 = sbr.rel (%p387) target = $region52
        $region51: #{tpu_custom_call.1} parent=27 // pred_region
          %s391 = ssub.s32 128, 128
          %392 = vsyncadd %s368, %s391
          %s393 = smul.addr %s29, 128
          %s394 = scalar_lea.hbm %s3, %s393
          %s396 = sshll.u32 %s371, 4
          %s397 = int_to_ptr.vmem [resolvable:$true] %s396
          %399 = dma.vmem_to_hbm [thread:$0]  %s397, 128, %s394, %s368
        $region52: #{tpu_custom_call.1} parent=27 // pred_fallthru
          _
      $region28: #{tpu_custom_call.1} parent=5 // pred_fallthru
        _
      %p400 = scmp.le.s32.totalorder 2, %s20
      // Predicated region
      $region53: #{tpu_custom_call.1} parent=5 // pred_check
        %p401 = pneg %p400
      $region54: #{tpu_custom_call.1} parent=5 // pred_check_branch
        %403 = sbr.rel (%p401) target = $region56
      $region55: #{tpu_custom_call.1} parent=5 // pred_region
        %s404 = ssub.s32 %s20, 2
        // Predicated region
        $region57: #{tpu_custom_call.1} parent=55 // pred_check
          %p405 = pneg %p112
        $region58: #{tpu_custom_call.1} parent=55 // pred_check_branch
          %407 = sbr.rel (%p405) target = $region60
        $region59: #{tpu_custom_call.1} parent=55 // pred_region
          %s408 = sand.u32 %s97, 1
          %s409 = scalar_lea.sflag [#allocation6], %s408
          %s410 = sand.u32 %s97, 1
          %s411 = smul.addr %s410, 4
          %s412 = scalar_lea.vmem [#allocation9], %s411
          %413 = dma.done %s409, 64
        $region60: #{tpu_custom_call.1} parent=55 // pred_fallthru
          _
        // Predicated region
        $region61: #{tpu_custom_call.1} parent=55 // pred_check
          %p414 = pneg %p138
        $region62: #{tpu_custom_call.1} parent=55 // pred_check_branch
          %416 = sbr.rel (%p414) target = $region64
        $region63: #{tpu_custom_call.1} parent=55 // pred_region
          %s417 = sand.u32 %s123, 1
          %s418 = scalar_lea.sflag [#allocation11], %s417
          %s419 = sand.u32 %s123, 1
          %s420 = smul.addr %s419, 8
          %s421 = scalar_lea.vmem [#allocation10], %s420
          %422 = dma.done %s418, 128
        $region64: #{tpu_custom_call.1} parent=55 // pred_fallthru
          _
      $region56: #{tpu_custom_call.1} parent=5 // pred_fallthru
        _
    $region6: #{tpu_custom_call.1} parent=1 // loop_footer
      %s24 = sadd.s32 1, %s20
    $region7: #{tpu_custom_call.1} parent=1 // loop_footer_branch
      %19 = sbr.rel target = $region3
    $region8: #{tpu_custom_call.1} parent=1 // loop_exit
      _
    %423 = vsyncpa [#allocation5], 1
    %s424 = scalar_lea.sflag [#allocation5], 1
    %425 = vsyncpa %s424, 1
    %426 = vsyncpa [#allocation8], 1
    %s427 = scalar_lea.sflag [#allocation8], 1
    %428 = vsyncpa %s427, 1
    %429 = vsyncpa [#allocation6], 1
    %s430 = scalar_lea.sflag [#allocation6], 1
    %431 = vsyncpa %s430, 1
    %432 = vsyncpa [#allocation11], 1
    %s433 = scalar_lea.sflag [#allocation11], 1
    %434 = vsyncpa %s433, 1

</llo_original>
